<compile_context>
chip_gen: v5e
topology: v5e:2x2
jax: 0.10.0
libtpu: 0.0.40
codegen_flags: <defaults>
</compile_context>

<pallas_src>
import math

import jax
import jax.numpy as jnp
from jax.experimental import pallas as pl
from jax.experimental.pallas import tpu as pltpu


def _linreg_kernel(x_ref, w_ref, o_ref):
    # x_ref: (tn, F) batch tile in native layout (features along lanes)
    # w_ref: (1, F)  coefficient row, VMEM-resident across the whole grid
    # o_ref: (tn, 1) per-row dot products
    x = x_ref[...].astype(jnp.float32)          # upcast (supports bf16 inputs)
    w = w_ref[...].astype(jnp.float32)
    o_ref[...] = jnp.sum(x * w, axis=-1, keepdims=True).astype(o_ref.dtype)


def _round_up(a, b):
    return ((a + b - 1) // b) * b


def _choose_tn(n, f, itemsize, block_bytes, min_grid_steps=4):
    """Largest batch tile (multiple of 8 sublanes) whose x block fits the byte
    budget, capped by the data size and so the grid keeps a few steps for v7x
    dual-TensorCore sharding."""
    tn_budget = max(8, (block_bytes // (f * itemsize)) // 8 * 8)
    tn_data = _round_up(max(n, 1), 8)                        # don't exceed the data
    tn_split = _round_up(max(pl.cdiv(n, min_grid_steps), 1), 8)
    return max(8, min(tn_budget, tn_data, tn_split))


def linear_regressor_forward(x, weight, *, block_bytes=4 << 20):
    """Forward pass of LinearRegressor.

    x:      (N, num_in_feats), f32 or bf16
    weight: (1, num_in_feats)  -- torch coeffs.weight layout (no bias)
    returns y_hat: (N, 1) float32
    """
    N, F = x.shape
    assert weight.shape == (1, F)

    itemsize = jnp.dtype(x.dtype).itemsize
    # The minimum (tn=8) double-buffered x block must fit comfortably in scoped VMEM.
    # TODO(synk): for very large F, add an "arbitrary" F-reduction grid axis with an
    # f32 accumulator scratch (init/finalize via pl.when) instead of refusing.
    if 2 * F * 8 * itemsize > (16 << 20):
        raise ValueError(f"num_in_feats={F} too large for the single-block-per-row kernel")

    tn = _choose_tn(N, F, itemsize, block_bytes)
    grid = (pl.cdiv(N, tn),)

    return pl.pallas_call(
        _linreg_kernel,
        out_shape=jax.ShapeDtypeStruct((N, 1), jnp.float32),
        grid_spec=pltpu.PrefetchScalarGridSpec(
            num_scalar_prefetch=0,
            grid=grid,
            in_specs=[
                pl.BlockSpec((tn, F), lambda i: (i, 0)),   # x read once, native layout
                pl.BlockSpec((1, F), lambda i: (0, 0)),    # weight resident across grid
            ],
            out_specs=pl.BlockSpec((tn, 1), lambda i: (i, 0)),
        ),
        compiler_params=pltpu.CompilerParams(
            dimension_semantics=("parallel",),   # v7x: shard batch tiles across both TCs
        ),
    )(x, weight)


def init_weight(key, num_in_feats):
    """torch.nn.Linear default init: U[-1/sqrt(fan_in), 1/sqrt(fan_in)], no bias."""
    bound = 1.0 / math.sqrt(num_in_feats)
    return jax.random.uniform(key, (1, num_in_feats), jnp.float32, -bound, bound)


if __name__ == "__main__":
    key = jax.random.PRNGKey(0)
    wkey, xkey = jax.random.split(key)

    # Small demo shapes; N deliberately NOT a multiple of the chosen tile so the
    # partial-last-block path is exercised (no explicit padding anywhere).
    N, F = 200, 8
    weight = init_weight(wkey, F)
    x = jax.random.normal(xkey, (N, F), jnp.float32)

    y_hat = jax.block_until_ready(linear_regressor_forward(x, weight))

    y_ref = x @ weight.T
    assert y_hat.shape == (N, 1)
    assert jnp.allclose(y_hat, y_ref, atol=1e-5, rtol=1e-5)

    print("KERNEL_OK")
</pallas_src>

<mosaic_0001>
module attributes {stable_mosaic.version = 11 : i64} {
  func.func @_linreg_kernel(%arg0: i32, %arg1: memref<56x8xf32, #tpu.memory_space<vmem>>, %arg2: memref<1x8xf32, #tpu.memory_space<vmem>>, %arg3: memref<56x1xf32, #tpu.memory_space<vmem>>) attributes {dimension_semantics = [#tpu.dimension_semantics<parallel>], iteration_bounds = array<i64: 4>, scalar_prefetch = 0 : i64, scratch_operands = 0 : i64, tpu.core_type = #tpu.core_type<tc>, window_params = [{transform_indices = @transform_0, window_bounds = array<i64: 56, 8>}, {pipeline_mode = #tpu.pipeline_mode<synchronous>, transform_indices = @transform_1, window_bounds = array<i64: 1, 8>}, {transform_indices = @transform_2, window_bounds = array<i64: 56, 1>}]} {
    %c0 = arith.constant 0 : index
    %c0_0 = arith.constant 0 : index
    %0 = vector.load %arg1[%c0, %c0_0] : memref<56x8xf32, #tpu.memory_space<vmem>>, vector<56x8xf32>
    %c0_1 = arith.constant 0 : index
    %c0_2 = arith.constant 0 : index
    %1 = vector.load %arg2[%c0_1, %c0_2] : memref<1x8xf32, #tpu.memory_space<vmem>>, vector<1x8xf32>
    %2 = vector.broadcast %1 : vector<1x8xf32> to vector<56x8xf32>
    %3 = arith.mulf %0, %2 : vector<56x8xf32>
    %cst = arith.constant dense<0.000000e+00> : vector<56xf32>
    %4 = vector.multi_reduction <add>, %3, %cst [1] : vector<56x8xf32> to vector<56xf32>
    %5 = vector.shape_cast %4 : vector<56xf32> to vector<56x1xf32>
    %c0_3 = arith.constant 0 : index
    %c0_4 = arith.constant 0 : index
    %6 = vector.load %arg3[%c0_3, %c0_4] : memref<56x1xf32, #tpu.memory_space<vmem>>, vector<56x1xf32>
    tpu.vector_store %arg3[%c0_3, %c0_4], %5 {strides = array<i32>} : memref<56x1xf32, #tpu.memory_space<vmem>>, vector<56x1xf32>,
    return
  }
  func.func @transform_0(%arg0: i32) -> (i32, i32) {
    %c0_i32 = arith.constant 0 : i32
    %c0_i32_0 = arith.constant 0 : i32
    return %arg0, %c0_i32 : i32, i32
  }
  func.func @transform_1(%arg0: i32) -> (i32, i32) {
    %c0_i32 = arith.constant 0 : i32
    %c0_i32_0 = arith.constant 0 : i32
    %c0_i32_1 = arith.constant 0 : i32
    return %c0_i32, %c0_i32_0 : i32, i32
  }
  func.func @transform_2(%arg0: i32) -> (i32, i32) {
    %c0_i32 = arith.constant 0 : i32
    %c0_i32_0 = arith.constant 0 : i32
    return %arg0, %c0_i32 : i32, i32
  }
}

</mosaic_0001>

<llo_original>
// kernel: tpu_custom_call.1
$region0: #{tpu_custom_call.1}
  #allocation0 [shape = 'u32[]', space=smem, size = 0x4, offset = 0x4, fixed_abs, tag = 'smem constant byte address 0x4 - core index']
  #allocation1 [shape = 'u32[72,128]{1,0:T(1,128)}', space=vmem, size = 0x9000, scoped, tag = 'internal scratch']
  %s0 = inlined_call_operand.vmem [shape: f32[200,8], index: 0, kind: input, shape index: {}]
  %s1 = inlined_call_operand.vmem [shape: f32[1,8], index: 1, kind: input, shape index: {}]
  %s2 = inlined_call_operand.vmem [shape: f32[200,1], index: 2, kind: output, shape index: {}]
  %s3 = sld [smem:[#allocation0]]
  $region89: #{tpu_custom_call.1} parent=0
    _
  %s5 = ssub.s32 1, %s3
  %s6 = scalar_select 0, %s5, %s3
  $region1: #{tpu_custom_call.1} parent=0
    #allocation2 [shape = 'u8[57344]{0}', space=vmem, size = 0xe000, scoped, tag = 'output window, operand 0']
    loop: start=0, step=1, limit=6
    $region2: #{tpu_custom_call.1} parent=1 // loop_pre_header
      _
    $region3: #{tpu_custom_call.1} parent=1 // loop_header
      %s8 = sphi 0, %s12
      %p9 = scmp.ge.s32.totalorder %s8, 6
      %s18 = sphi 0, %s20
      %s21 = sphi 0, %s18
      %s22 = sphi 0, %s21
      %s38 = sphi 0, %s22
      %s42 = sphi 0, %s42
      %s44 = sphi 0, %s42
      %s45 = sphi 0, %s44
      %s59 = sphi 0, %s45
      %s65 = sphi 0, %s67
      %s68 = sphi 0, %s65
      %s69 = sphi 0, %s68
      %s85 = sphi 0, %s69
    $region4: #{tpu_custom_call.1} parent=1 // loop_header_branch
      %11 = sbr.rel (%p9) target = $region8
    $region5: #{tpu_custom_call.1} parent=1 // loop_body
      %s13 = ssub.s32 %s8, 1
      %s14 = ssub.s32 %s8, 2
      %s15 = sadd.s32 %s8, 1
      %s16 = ssub.s32 %s8, %s15
      %p17 = scmp.eq.s32.totalorder %s16, 0
      %s19 = sadd.s32 %s18, 1
      %s20 = scalar_select %p17, %s18, %s19
      %p23 = pneg %p17
      %p24 = scmp.eq.s32.totalorder %s8, 3
      %p25 = por %p23, %p24
      %p26 = scmp.ne.s32.totalorder %s18, %s21
      %p27 = scmp.eq.s32.totalorder %s8, 0
      %p28 = por %p26, %p27
      %p29 = scmp.ne.s32.totalorder %s18, %s21
      %p30 = scmp.eq.s32.totalorder %s13, 3
      %p31 = por %p29, %p30
      %p32 = scmp.ne.s32.totalorder %s21, %s22
      %p33 = scmp.eq.s32.totalorder %s13, 0
      %p34 = por %p32, %p33
      %p35 = scmp.ne.s32.totalorder %s21, %s22
      %p36 = scmp.eq.s32.totalorder %s14, 3
      %p37 = por %p35, %p36
      %p39 = scmp.ne.s32.totalorder %s22, %s38
      %p40 = scmp.eq.s32.totalorder %s14, 0
      %p41 = por %p39, %p40
      %s43 = sadd.s32 %s42, 1
      %p46 = scmp.eq.s32.totalorder %s8, 3
      %p47 = scmp.ne.s32.totalorder %s42, %s44
      %p48 = scmp.eq.s32.totalorder %s8, 0
      %p49 = por %p47, %p48
      %p50 = scmp.ne.s32.totalorder %s42, %s44
      %p51 = scmp.eq.s32.totalorder %s13, 3
      %p52 = por %p50, %p51
      %p53 = scmp.ne.s32.totalorder %s44, %s45
      %p54 = scmp.eq.s32.totalorder %s13, 0
      %p55 = por %p53, %p54
      %p56 = scmp.ne.s32.totalorder %s44, %s45
      %p57 = scmp.eq.s32.totalorder %s14, 3
      %p58 = por %p56, %p57
      %p60 = scmp.ne.s32.totalorder %s45, %s59
      %p61 = scmp.eq.s32.totalorder %s14, 0
      %p62 = por %p60, %p61
      %s63 = ssub.s32 %s8, %s15
      %p64 = scmp.eq.s32.totalorder %s63, 0
      %s66 = sadd.s32 %s65, 1
      %s67 = scalar_select %p64, %s65, %s66
      %p70 = pneg %p64
      %p71 = scmp.eq.s32.totalorder %s8, 3
      %p72 = por %p70, %p71
      %p73 = scmp.ne.s32.totalorder %s65, %s68
      %p74 = scmp.eq.s32.totalorder %s8, 0
      %p75 = por %p73, %p74
      %p76 = scmp.ne.s32.totalorder %s65, %s68
      %p77 = scmp.eq.s32.totalorder %s13, 3
      %p78 = por %p76, %p77
      %p79 = scmp.ne.s32.totalorder %s68, %s69
      %p80 = scmp.eq.s32.totalorder %s13, 0
      %p81 = por %p79, %p80
      %p82 = scmp.ne.s32.totalorder %s68, %s69
      %p83 = scmp.eq.s32.totalorder %s14, 3
      %p84 = por %p82, %p83
      %p86 = scmp.ne.s32.totalorder %s69, %s85
      %p87 = scmp.eq.s32.totalorder %s14, 0
      %p88 = por %p86, %p87
      %p89 = scmp.le.s32.totalorder 1, %s8
      %p90 = scmp.lt.s32.totalorder %s8, 5
      %p91 = pnand %p89, %p90
      %p92 = pneg %p91
      // Predicated region
      $region9: #{tpu_custom_call.1} parent=5 // pred_check
        _
      $region10: #{tpu_custom_call.1} parent=5 // pred_check_branch
        %94 = sbr.rel (%p91) target = $region12
      $region11: #{tpu_custom_call.1} parent=5 // pred_region
        %s95 = ssub.s32 %s8, 1
        // Predicated region
        $region13: #{tpu_custom_call.1} parent=11 // pred_check
          %p96 = pneg %p55
        $region14: #{tpu_custom_call.1} parent=11 // pred_check_branch
          %98 = sbr.rel (%p96) target = $region16
        $region15: #{tpu_custom_call.1} parent=11 // pred_region
          _
        $region16: #{tpu_custom_call.1} parent=11 // pred_fallthru
          _
      $region12: #{tpu_custom_call.1} parent=5 // pred_fallthru
        _
      %p99 = scmp.lt.s32.totalorder %s8, 4
      // Predicated region
      $region17: #{tpu_custom_call.1} parent=5 // pred_check
        %p100 = pneg %p99
      $region18: #{tpu_custom_call.1} parent=5 // pred_check_branch
        %102 = sbr.rel (%p100) target = $region20
      $region19: #{tpu_custom_call.1} parent=5 // pred_region
        // Predicated region
        $region21: #{tpu_custom_call.1} parent=19 // pred_check
          %p103 = pneg %p28
        $region22: #{tpu_custom_call.1} parent=19 // pred_check_branch
          %105 = sbr.rel (%p103) target = $region24
        $region23: #{tpu_custom_call.1} parent=19 // pred_region
          %s106 = smul.u32 7, %s8
          %s107 = ssub.s32 25, %s106
          %p108 = scmp.lt.s32.totalorder %s107, 7
          %s109 = scalar_select %p108, %s107, 7
          %s110 = smul.u32 8, %s109
          %p111 = scmp.lt.s32.totalorder %s106, 24
          %s112 = scalar_select %p111, %s106, 24
          %s113 = smul.addr %s112, 8
          %s114 = scalar_lea.vmem %s0, %s113
          %s115 = smul.u32 7, %s8
          %s116 = ssub.s32 25, %s115
          %p117 = scmp.lt.s32.totalorder %s116, 7
          %s118 = scalar_select %p117, %s116, 7
          %s119 = smul.u32 8, %s118
        $region24: #{tpu_custom_call.1} parent=19 // pred_fallthru
          _
      $region20: #{tpu_custom_call.1} parent=5 // pred_fallthru
        _
      %p120 = scmp.le.s32.totalorder 1, %s8
      %p121 = scmp.lt.s32.totalorder %s8, 5
      %p122 = pnand %p120, %p121
      %p123 = pneg %p122
      // Predicated region
      $region25: #{tpu_custom_call.1} parent=5 // pred_check
        _
      $region26: #{tpu_custom_call.1} parent=5 // pred_check_branch
        %125 = sbr.rel (%p122) target = $region28
      $region27: #{tpu_custom_call.1} parent=5 // pred_region
        %s126 = ssub.s32 %s8, 1
        %s127 = smul.u32 7, %s13
        %s128 = ssub.s32 25, %s127
        %p129 = scmp.lt.s32.totalorder %s128, 7
        %s130 = scalar_select %p129, %s128, 7
        %s131 = smul.u32 8, %s130
        %p132 = scmp.lt.s32.totalorder %s127, 24
        %s133 = scalar_select %p132, %s127, 24
        %s134 = smul.addr %s133, 8
        %s135 = scalar_lea.vmem %s0, %s134
        %p136 = pneg %p34
        %p137 = pneg %p31
        %p138 = pneg %p55
        %p139 = pneg %p52
        %p140 = pneg %p81
        %p141 = pneg %p78
        %s142 = sand.u32 %s68, 1
        %s143 = sand.u32 %s68, 1
        %s144 = smul.addr %s143, 56
        %s145 = scalar_lea.vmem [#allocation2], %s144
        %s146 = smul.u32 7, %s13
        %s147 = ssub.s32 25, %s146
        %p148 = scmp.lt.s32.totalorder %s147, 7
        %s149 = scalar_select %p148, %s147, 7
        %s150 = smul.u32 8, %s149
        %p151 = scmp.lt.s32.totalorder %s146, 24
        %s152 = scalar_select %p151, %s146, 24
        %s153 = smul.addr %s152, 8
        %s154 = scalar_lea.vmem %s0, %s153
        %s155 = smul.u32 7, %s13
        %s156 = ssub.s32 25, %s155
        %p157 = scmp.lt.s32.totalorder %s156, 7
        %s158 = scalar_select %p157, %s156, 7
        %s159 = smul.u32 8, %s158
        %s160 = smul.u32 7, %s13
        %s161 = ssub.s32 25, %s160
        %p162 = scmp.lt.s32.totalorder %s161, 7
        %s163 = scalar_select %p162, %s161, 7
        %s164 = smul.u32 8, %s163
        %v165 = vld [vmem:[%s154] sm:$0xff]
        %v166 = vld [vmem:[%s154 + $0x8] sm:$0xff]
        %v167 = vld [vmem:[%s154 + $0x10] sm:$0xff]
        %v168 = vld [vmem:[%s154 + $0x18] sm:$0xff]
        %v169 = vld [vmem:[%s154 + $0x20] sm:$0xff]
        %v170 = vld [vmem:[%s154 + $0x28] sm:$0xff]
        %v171 = vld [vmem:[%s154 + $0x30] sm:$0xff]
        %v172 = vld [vmem:[%s1] sm:$0x1]
        %v174 = vperm.slane %v172, 0
        %v176 = vmul.f32 %v165, %v174
        %v177 = vmul.f32 %v166, %v174
        %v178 = vmul.f32 %v167, %v174
        %v179 = vmul.f32 %v168, %v174
        %v180 = vmul.f32 %v169, %v174
        %v181 = vmul.f32 %v170, %v174
        %v182 = vmul.f32 %v171, %v174
        %vm183 = vcmask 64512
        %v184 = vsel %vm183, %v176, 0.0
        %185 = vadd.xlane.f32.xlu0 %v184
        %v186 = vpop.xlane.xlu0 %185
        %v187 = vsel %vm183, %v177, 0.0
        %188 = vadd.xlane.f32.xlu0 %v187
        %v189 = vpop.xlane.xlu0 %188
        %v190 = vsel %vm183, %v178, 0.0
        %191 = vadd.xlane.f32.xlu0 %v190
        %v192 = vpop.xlane.xlu0 %191
        %v193 = vsel %vm183, %v179, 0.0
        %194 = vadd.xlane.f32.xlu0 %v193
        %v195 = vpop.xlane.xlu0 %194
        %v196 = vsel %vm183, %v180, 0.0
        %197 = vadd.xlane.f32.xlu0 %v196
        %v198 = vpop.xlane.xlu0 %197
        %v199 = vsel %vm183, %v181, 0.0
        %200 = vadd.xlane.f32.xlu0 %v199
        %v201 = vpop.xlane.xlu0 %200
        %v202 = vsel %vm183, %v182, 0.0
        %203 = vadd.xlane.f32.xlu0 %v202
        %v204 = vpop.xlane.xlu0 %203
        %vm205 = vcmask 7168
        %206 = vst.msk [vmem:[%s145] sm:$0xff] %vm205, %v186
        %207 = vst.msk [vmem:[%s145 + $0x8] sm:$0xff] %vm205, %v189
        %208 = vst.msk [vmem:[%s145 + $0x10] sm:$0xff] %vm205, %v192
        %209 = vst.msk [vmem:[%s145 + $0x18] sm:$0xff] %vm205, %v195
        %210 = vst.msk [vmem:[%s145 + $0x20] sm:$0xff] %vm205, %v198
        %211 = vst.msk [vmem:[%s145 + $0x28] sm:$0xff] %vm205, %v201
        %212 = vst.msk [vmem:[%s145 + $0x30] sm:$0xff] %vm205, %v204
        %s213 = sand.u32 %s68, 1
        %s214 = sand.u32 %s68, 1
        %s215 = smul.addr %s214, 56
        %s216 = scalar_lea.vmem [#allocation2], %s215
        // Predicated region
        $region29: #{tpu_custom_call.1} parent=27 // pred_check
          %p217 = pneg %p78
        $region30: #{tpu_custom_call.1} parent=27 // pred_check_branch
          %219 = sbr.rel (%p217) target = $region32
        $region31: #{tpu_custom_call.1} parent=27 // pred_region
          %s220 = smul.u32 7, %s13
          %s221 = ssub.s32 25, %s220
          %p222 = scmp.lt.s32.totalorder %s221, 7
          %s223 = scalar_select %p222, %s221, 7
          %s224 = smul.u32 8, %s223
          %p225 = scmp.ne.s32.totalorder 0, %s224
          %s226 = smul.addr %s220, 8
          %s227 = scalar_lea.vmem %s2, %s226
          // Predicated region
          $region33: #{tpu_custom_call.1} parent=31 // pred_check
            %p228 = pneg %p225
          $region34: #{tpu_custom_call.1} parent=31 // pred_check_branch
            %230 = sbr.rel (%p228) target = $region36
          $region35: #{tpu_custom_call.1} parent=31 // pred_region
            // Predicated region
            $region37: #{tpu_custom_call.1} parent=35 // pred_check
              _
            $region38: #{tpu_custom_call.1} parent=35 // pred_check_branch
              %232 = sbr.rel (0) target = $region40
            $region39: #{tpu_custom_call.1} parent=35 // pred_region
              // Predicated region
              $region59: #{tpu_custom_call.1} parent=39 // pred_check
                _
              $region60: #{tpu_custom_call.1} parent=39 // pred_check_branch
                %295 = sbr.rel (0) target = $region62
              $region61: #{tpu_custom_call.1} parent=39 // pred_region
                %s296 = sdiv.u32.pop %s223, 7
                %s297 = srem.u32.pop %s223, 7
                // While loop
                $region63: #{tpu_custom_call.1} parent=61 // loop_pre_header
                  _
                $region64: #{tpu_custom_call.1} parent=61 // loop_header
                  %s299 = sphi 0, %s301
                  %p300 = scmp.ge.s32.totalorder %s299, %s296
                  %s304 = sphi 0, %s323
                  %s305 = sphi %s216, %s326
                  %s306 = sphi %s227, %s327
                $region65: #{tpu_custom_call.1} parent=61 // loop_header_branch
                  %303 = sbr.rel (%p300) target = $region69
                $region66: #{tpu_custom_call.1} parent=61 // loop_body
                  %v307 = vld [vmem:[%s305] sm:$0xff]
                  %308 = vst [vmem:[%s306] sm:$0xff] %v307
                  %v309 = vld [vmem:[%s305 + $0x8] sm:$0xff]
                  %310 = vst [vmem:[%s306 + $0x8] sm:$0xff] %v309
                  %v311 = vld [vmem:[%s305 + $0x10] sm:$0xff]
                  %312 = vst [vmem:[%s306 + $0x10] sm:$0xff] %v311
                  %v313 = vld [vmem:[%s305 + $0x18] sm:$0xff]
                  %314 = vst [vmem:[%s306 + $0x18] sm:$0xff] %v313
                  %v315 = vld [vmem:[%s305 + $0x20] sm:$0xff]
                  %316 = vst [vmem:[%s306 + $0x20] sm:$0xff] %v315
                  %v317 = vld [vmem:[%s305 + $0x28] sm:$0xff]
                  %318 = vst [vmem:[%s306 + $0x28] sm:$0xff] %v317
                  %v319 = vld [vmem:[%s305 + $0x30] sm:$0xff]
                  %320 = vst [vmem:[%s306 + $0x30] sm:$0xff] %v319
                  %s321 = sadd.s32 1, %s304
                  %p322 = scmp.ge.s32.totalorder %s321, %s296
                  %s323 = scalar_select %p322, 0, %s321
                  %s324 = smul.u32 %s323, 56
                  %s325 = smul.u32 %s323, 56
                  %s326 = scalar_lea.vmem %s216, %s324 [#allocation2]
                  %s327 = scalar_lea.vmem %s227, %s325
                $region67: #{tpu_custom_call.1} parent=61 // loop_footer
                  %s301 = sadd.s32 %s299, 1
                $region68: #{tpu_custom_call.1} parent=61 // loop_footer_branch
                  %298 = sbr.rel target = $region64
                $region69: #{tpu_custom_call.1} parent=61 // loop_exit
                  _
                %s328 = sdiv.u32.pop %s223, 7
                %s329 = srem.u32.pop %s223, 7
                %s330 = smul.u32 %s328, 7
                %s331 = smul.u32 8, %s330
                %s332 = scalar_lea.vmem %s216, %s331 [#allocation2]
                %s333 = smul.u32 8, %s330
                %s334 = scalar_lea.vmem %s227, %s333
                // While loop
                $region70: #{tpu_custom_call.1} parent=61 // loop_pre_header
                  _
                $region71: #{tpu_custom_call.1} parent=61 // loop_header
                  %s336 = sphi 0, %s338
                  %p337 = scmp.ge.s32.totalorder %s336, %s329
                  %s341 = sphi 0, %s348
                  %s342 = sphi %s332, %s351
                  %s343 = sphi %s334, %s352
                $region72: #{tpu_custom_call.1} parent=61 // loop_header_branch
                  %340 = sbr.rel (%p337) target = $region76
                $region73: #{tpu_custom_call.1} parent=61 // loop_body
                  %v344 = vld [vmem:[%s342] sm:$0xff]
                  %345 = vst [vmem:[%s343] sm:$0xff] %v344
                  %s346 = sadd.s32 1, %s341
                  %p347 = scmp.ge.s32.totalorder %s346, %s329
                  %s348 = scalar_select %p347, 0, %s346
                  %s349 = smul.u32 %s348, 8
                  %s350 = smul.u32 %s348, 8
                  %s351 = scalar_lea.vmem %s332, %s349 [#allocation2]
                  %s352 = scalar_lea.vmem %s334, %s350
                $region74: #{tpu_custom_call.1} parent=61 // loop_footer
                  %s338 = sadd.s32 %s336, 1
                $region75: #{tpu_custom_call.1} parent=61 // loop_footer_branch
                  %335 = sbr.rel target = $region71
                $region76: #{tpu_custom_call.1} parent=61 // loop_exit
                  _
              $region62: #{tpu_custom_call.1} parent=39 // pred_fallthru
                _
              // Predicated region
              $region77: #{tpu_custom_call.1} parent=39 // pred_check
                _
              $region78: #{tpu_custom_call.1} parent=39 // pred_check_branch
                %354 = sbr.rel target = $region80
              $region79: #{tpu_custom_call.1} parent=39 // pred_region
                _
              $region80: #{tpu_custom_call.1} parent=39 // pred_fallthru
                _
            $region40: #{tpu_custom_call.1} parent=35 // pred_fallthru
              _
            // Predicated region
            $region41: #{tpu_custom_call.1} parent=35 // pred_check
              _
            $region42: #{tpu_custom_call.1} parent=35 // pred_check_branch
              %234 = sbr.rel target = $region44
            $region43: #{tpu_custom_call.1} parent=35 // pred_region
              %s236 = ssub.s32 256, 1
              %s237 = sdiv.u32.pop %s223, 7
              %s238 = srem.u32.pop %s223, 7
              // While loop
              $region45: #{tpu_custom_call.1} parent=43 // loop_pre_header
                _
              $region46: #{tpu_custom_call.1} parent=43 // loop_header
                %s240 = sphi 0, %s242
                %p241 = scmp.ge.s32.totalorder %s240, %s237
                %s245 = sphi 0, %s264
                %s246 = sphi %s216, %s267
                %s247 = sphi %s227, %s268
              $region47: #{tpu_custom_call.1} parent=43 // loop_header_branch
                %244 = sbr.rel (%p241) target = $region51
              $region48: #{tpu_custom_call.1} parent=43 // loop_body
                %v248 = vld [vmem:[%s246] sm:%s236]
                %249 = vst [vmem:[%s247] sm:%s236] %v248
                %v250 = vld [vmem:[%s246 + $0x8] sm:%s236]
                %251 = vst [vmem:[%s247 + $0x8] sm:%s236] %v250
                %v252 = vld [vmem:[%s246 + $0x10] sm:%s236]
                %253 = vst [vmem:[%s247 + $0x10] sm:%s236] %v252
                %v254 = vld [vmem:[%s246 + $0x18] sm:%s236]
                %255 = vst [vmem:[%s247 + $0x18] sm:%s236] %v254
                %v256 = vld [vmem:[%s246 + $0x20] sm:%s236]
                %257 = vst [vmem:[%s247 + $0x20] sm:%s236] %v256
                %v258 = vld [vmem:[%s246 + $0x28] sm:%s236]
                %259 = vst [vmem:[%s247 + $0x28] sm:%s236] %v258
                %v260 = vld [vmem:[%s246 + $0x30] sm:%s236]
                %261 = vst [vmem:[%s247 + $0x30] sm:%s236] %v260
                %s262 = sadd.s32 1, %s245
                %p263 = scmp.ge.s32.totalorder %s262, %s237
                %s264 = scalar_select %p263, 0, %s262
                %s265 = smul.u32 %s264, 56
                %s266 = smul.u32 %s264, 56
                %s267 = scalar_lea.vmem %s216, %s265 [#allocation2]
                %s268 = scalar_lea.vmem %s227, %s266
              $region49: #{tpu_custom_call.1} parent=43 // loop_footer
                %s242 = sadd.s32 %s240, 1
              $region50: #{tpu_custom_call.1} parent=43 // loop_footer_branch
                %239 = sbr.rel target = $region46
              $region51: #{tpu_custom_call.1} parent=43 // loop_exit
                _
              %s269 = sdiv.u32.pop %s223, 7
              %s270 = srem.u32.pop %s223, 7
              %s271 = smul.u32 %s269, 7
              %s272 = smul.u32 8, %s271
              %s273 = scalar_lea.vmem %s216, %s272 [#allocation2]
              %s274 = smul.u32 8, %s271
              %s275 = scalar_lea.vmem %s227, %s274
              // While loop
              $region52: #{tpu_custom_call.1} parent=43 // loop_pre_header
                _
              $region53: #{tpu_custom_call.1} parent=43 // loop_header
                %s277 = sphi 0, %s279
                %p278 = scmp.ge.s32.totalorder %s277, %s270
                %s282 = sphi 0, %s289
                %s283 = sphi %s273, %s292
                %s284 = sphi %s275, %s293
              $region54: #{tpu_custom_call.1} parent=43 // loop_header_branch
                %281 = sbr.rel (%p278) target = $region58
              $region55: #{tpu_custom_call.1} parent=43 // loop_body
                %v285 = vld [vmem:[%s283] sm:%s236]
                %286 = vst [vmem:[%s284] sm:%s236] %v285
                %s287 = sadd.s32 1, %s282
                %p288 = scmp.ge.s32.totalorder %s287, %s270
                %s289 = scalar_select %p288, 0, %s287
                %s290 = smul.u32 %s289, 8
                %s291 = smul.u32 %s289, 8
                %s292 = scalar_lea.vmem %s273, %s290 [#allocation2]
                %s293 = scalar_lea.vmem %s275, %s291
              $region56: #{tpu_custom_call.1} parent=43 // loop_footer
                %s279 = sadd.s32 %s277, 1
              $region57: #{tpu_custom_call.1} parent=43 // loop_footer_branch
                %276 = sbr.rel target = $region53
              $region58: #{tpu_custom_call.1} parent=43 // loop_exit
                _
            $region44: #{tpu_custom_call.1} parent=35 // pred_fallthru
              _
          $region36: #{tpu_custom_call.1} parent=31 // pred_fallthru
            _
          %355 = vnop
        $region32: #{tpu_custom_call.1} parent=27 // pred_fallthru
          _
      $region28: #{tpu_custom_call.1} parent=5 // pred_fallthru
        _
      %p356 = scmp.le.s32.totalorder 2, %s8
      // Predicated region
      $region81: #{tpu_custom_call.1} parent=5 // pred_check
        %p357 = pneg %p356
      $region82: #{tpu_custom_call.1} parent=5 // pred_check_branch
        %359 = sbr.rel (%p357) target = $region84
      $region83: #{tpu_custom_call.1} parent=5 // pred_region
        %s360 = ssub.s32 %s8, 2
        // Predicated region
        $region85: #{tpu_custom_call.1} parent=83 // pred_check
          %p361 = pneg %p84
        $region86: #{tpu_custom_call.1} parent=83 // pred_check_branch
          %363 = sbr.rel (%p361) target = $region88
        $region87: #{tpu_custom_call.1} parent=83 // pred_region
          %s364 = sand.u32 %s69, 1
          %s365 = sand.u32 %s69, 1
          %s366 = smul.addr %s365, 56
          %s367 = scalar_lea.vmem [#allocation2], %s366
        $region88: #{tpu_custom_call.1} parent=83 // pred_fallthru
          _
      $region84: #{tpu_custom_call.1} parent=5 // pred_fallthru
        _
    $region6: #{tpu_custom_call.1} parent=1 // loop_footer
      %s12 = sadd.s32 1, %s8
    $region7: #{tpu_custom_call.1} parent=1 // loop_footer_branch
      %7 = sbr.rel target = $region3
    $region8: #{tpu_custom_call.1} parent=1 // loop_exit
      _

</llo_original>
